<compile_context>
chip_gen: v5e
topology: v5e:2x2
jax: 0.10.0
libtpu: 0.0.40
codegen_flags: <defaults>
</compile_context>

<pallas_src>
import jax
import jax.numpy as jnp
from jax.experimental import pallas as pl
from jax.experimental.pallas import tpu as pltpu

HIDDEN1 = 32
HIDDEN2 = 16
OUT = 2


def advancednet_kernel(x_ref, w1_ref, b1_ref, w2_ref, b2_ref, w3_ref, b3_ref,
                       o_ref):
    # Feature-major compute: batch is the lane (last) axis throughout.
    # Transpose the f32 tile (native 32-bit XLU path), then cast to bf16.
    xt = x_ref[...].T.astype(jnp.bfloat16)                       # (D, TB)

    # layer1: Linear(D, 32) + ReLU   (bf16 operands, f32 MXU accumulation)
    h = jnp.dot(w1_ref[...], xt, preferred_element_type=jnp.float32)   # (32, TB)
    h = jnp.maximum(h + b1_ref[...], 0.0)

    # layer2: BatchNorm1d(32) eval -> affine folded into w2/b2 (fold_params)

    # layer3: Linear(32, 16) + ReLU
    h = jnp.dot(w2_ref[...], h.astype(jnp.bfloat16),
                preferred_element_type=jnp.float32)                    # (16, TB)
    h = jnp.maximum(h + b2_ref[...], 0.0)

    # layer4: Dropout(0.5) -> identity in eval mode

    # output_layer + 2-class softmax.  w3/b3 were pre-multiplied by
    # [[1,-1],[-1,1]] so row i of d is logit_i - logit_{1-i};
    # softmax(logits)_i == sigmoid(d_i).  Pure elementwise, lane-dense store.
    d = jnp.dot(w3_ref[...], h.astype(jnp.bfloat16),
                preferred_element_type=jnp.float32)                    # (2, TB)
    d = d + b3_ref[...]
    o_ref[...] = 1.0 / (1.0 + jnp.exp(-d))


def _pick_tile(B, D):
    """Batch tile + VMEM limit sized per TPU generation."""
    try:
        vmem_cap = pltpu.get_tpu_info().vmem_capacity_bytes
    except Exception:
        vmem_cap = 64 * 1024 * 1024              # conservative (v7x-sized) fallback
    # ~48 MiB on v7x (64 MiB VMEM/TC), capped at ~100 MiB on v5e/v6e (128 MiB).
    vmem_limit = max(min(vmem_cap - (16 << 20), 100 << 20), 16 << 20)

    # Approx. VMEM bytes per batch row in one grid step:
    #   double-buffered f32 x tile + transposed f32 + bf16 copies
    #   + f32 activations (+ bf16 copies) + double-buffered f32 output.
    per_row = (3 * D * 4 + 2 * D * 2
               + (HIDDEN1 + HIDDEN2) * (4 + 2)
               + 3 * OUT * 4)
    tb = (vmem_limit // 2) // per_row
    tb = max(256, min(32768, (tb // 256) * 256))   # 256-lane multiples (v6e/v7x MXU)
    if B <= tb:
        return B, 1, vmem_limit                    # single full block, no padding
    return tb, pl.cdiv(B, tb), vmem_limit          # ragged last block masked by Pallas


def advancednet_forward(x, folded_params):
    """x: (B, D) float32.  folded_params: dict from fold_params()."""
    B, D = x.shape
    w1, b1 = folded_params["w1"], folded_params["b1"]
    w2, b2 = folded_params["w2"], folded_params["b2"]
    w3, b3 = folded_params["w3"], folded_params["b3"]

    tb, n_tiles, vmem_limit = _pick_tile(B, D)

    def resident(shape):
        # Weights/biases: same block every grid step -> stay resident in VMEM.
        return pl.BlockSpec(shape, lambda i: (0, 0))

    flops = 2 * B * (D * HIDDEN1 + HIDDEN1 * HIDDEN2 + HIDDEN2 * OUT)
    bytes_accessed = (
        B * D * 4 + B * OUT * 4                              # x (f32) + output (f32)
        + (HIDDEN1 * D + HIDDEN2 * HIDDEN1 + OUT * HIDDEN2) * 2   # bf16 weights
        + (HIDDEN1 + HIDDEN2 + OUT) * 4)                     # f32 biases

    out_t = pl.pallas_call(
        advancednet_kernel,
        out_shape=jax.ShapeDtypeStruct((OUT, B), jnp.float32),
        grid=(n_tiles,),
        in_specs=[
            pl.BlockSpec((tb, D), lambda i: (i, 0)),         # x: tiled over batch
            resident((HIDDEN1, D)), resident((HIDDEN1, 1)),
            resident((HIDDEN2, HIDDEN1)), resident((HIDDEN2, 1)),
            resident((OUT, HIDDEN2)), resident((OUT, 1)),
        ],
        out_specs=pl.BlockSpec((OUT, tb), lambda i: (0, i)),  # lane-dense (2, TB)
        compiler_params=pltpu.CompilerParams(
            dimension_semantics=("parallel",),                # megacore sharding on v7x
            vmem_limit_bytes=int(vmem_limit),
        ),
        cost_estimate=pl.CostEstimate(
            flops=flops,
            transcendentals=B * OUT,
            bytes_accessed=bytes_accessed,
        ),
    )(x, w1, b1, w2, b2, w3, b3)

    # Tiny (2, B) -> (B, 2) layout plumbing outside the kernel.
    return out_t.T


def init_params(key, D):
    """Deterministic synthetic parameters in PyTorch-native (out, in) layout."""
    keys = jax.random.split(key, 10)
    w1 = jax.random.normal(keys[0], (HIDDEN1, D), jnp.float32) * 0.1
    b1 = jax.random.normal(keys[1], (HIDDEN1, 1), jnp.float32) * 0.1
    gamma = 1.0 + 0.1 * jax.random.normal(keys[2], (HIDDEN1, 1), jnp.float32)
    beta = 0.1 * jax.random.normal(keys[3], (HIDDEN1, 1), jnp.float32)
    running_mean = 0.1 * jax.random.normal(keys[4], (HIDDEN1, 1), jnp.float32)
    running_var = jnp.abs(
        1.0 + 0.1 * jax.random.normal(keys[5], (HIDDEN1, 1), jnp.float32))
    w2 = jax.random.normal(keys[6], (HIDDEN2, HIDDEN1), jnp.float32) * 0.1
    b2 = jax.random.normal(keys[7], (HIDDEN2, 1), jnp.float32) * 0.1
    w3 = jax.random.normal(keys[8], (OUT, HIDDEN2), jnp.float32) * 0.1
    b3 = jax.random.normal(keys[9], (OUT, 1), jnp.float32) * 0.1
    return dict(w1=w1, b1=b1, gamma=gamma, beta=beta,
                running_mean=running_mean, running_var=running_var, eps=1e-5,
                w2=w2, b2=b2, w3=w3, b3=b3)


def fold_params(p):
    """One-time fold: BN(eval) into layer3, 2-class softmax "flip" into w3/b3.

    BN(eval) is affine: y = scale*h + shift.  Folding an affine into the
    *following* Linear is always exact (independent of ReLU placement):
        W2 @ (scale*h + shift) + b2 == (W2 * scale^T) @ h + (W2 @ shift + b2)
    """
    scale = p["gamma"] / jnp.sqrt(p["running_var"] + p["eps"])   # (32, 1)
    shift = p["beta"] - p["running_mean"] * scale                # (32, 1)
    w2f = p["w2"] * scale.T                                      # (16, 32)
    b2f = p["w2"] @ shift + p["b2"]                              # (16, 1)
    # softmax over 2 classes == sigmoid(logit_i - logit_{1-i}).
    flip = jnp.array([[1.0, -1.0], [-1.0, 1.0]], jnp.float32)
    w3d = flip @ p["w3"]                                         # (2, 16)
    b3d = flip @ p["b3"]                                         # (2, 1)
    return dict(w1=p["w1"].astype(jnp.bfloat16), b1=p["b1"],
                w2=w2f.astype(jnp.bfloat16), b2=b2f,
                w3=w3d.astype(jnp.bfloat16), b3=b3d)


def reference_forward(x, p):
    """Pure-JAX reference: unfolded BN, standard softmax (bf16 matmul operands
    to mirror the kernel's MXU precision)."""
    h = jnp.dot(x.astype(jnp.bfloat16), p["w1"].astype(jnp.bfloat16).T,
                preferred_element_type=jnp.float32) + p["b1"][:, 0]
    h = jnp.maximum(h, 0.0)
    scale = (p["gamma"] / jnp.sqrt(p["running_var"] + p["eps"]))[:, 0]
    shift = p["beta"][:, 0] - p["running_mean"][:, 0] * scale
    h = h * scale + shift
    h = jnp.maximum(
        jnp.dot(h.astype(jnp.bfloat16), p["w2"].astype(jnp.bfloat16).T,
                preferred_element_type=jnp.float32) + p["b2"][:, 0], 0.0)
    logits = jnp.dot(h.astype(jnp.bfloat16), p["w3"].astype(jnp.bfloat16).T,
                     preferred_element_type=jnp.float32) + p["b3"][:, 0]
    return jax.nn.softmax(logits, axis=1)


if __name__ == "__main__":
    key = jax.random.PRNGKey(0)
    kx, kp = jax.random.split(key)

    B, D = 8, 16                      # small tabular input (batch, features)
    x = jax.random.normal(kx, (B, D), jnp.float32)
    raw_params = init_params(kp, D)
    folded = fold_params(raw_params)

    out = advancednet_forward(x, folded)
    out = jax.block_until_ready(out)

    ref = reference_forward(x, raw_params)
    assert out.shape == (B, OUT)
    # Tolerances cover bf16 matmul operands and the BN / softmax-flip folds.
    assert jnp.allclose(out, ref, atol=3e-3, rtol=3e-3), "mismatch vs reference"
    assert jnp.allclose(jnp.sum(out, axis=1), 1.0, atol=2e-3), \
        "softmax rows must sum to ~1"

    print("KERNEL_OK")
</pallas_src>

<mosaic_0001>
module attributes {stable_mosaic.version = 11 : i64} {
  func.func @advancednet_kernel(%arg0: i32, %arg1: memref<8x16xf32, #tpu.memory_space<vmem>>, %arg2: memref<32x16xbf16, #tpu.memory_space<vmem>>, %arg3: memref<32x1xf32, #tpu.memory_space<vmem>>, %arg4: memref<16x32xbf16, #tpu.memory_space<vmem>>, %arg5: memref<16x1xf32, #tpu.memory_space<vmem>>, %arg6: memref<2x16xbf16, #tpu.memory_space<vmem>>, %arg7: memref<2x1xf32, #tpu.memory_space<vmem>>, %arg8: memref<2x8xf32, #tpu.memory_space<vmem>>) attributes {dimension_semantics = [#tpu.dimension_semantics<parallel>], iteration_bounds = array<i64: 1>, scalar_prefetch = 0 : i64, scratch_operands = 0 : i64, tpu.core_type = #tpu.core_type<tc>, window_params = [{transform_indices = @transform_0, window_bounds = array<i64: 8, 16>}, {pipeline_mode = #tpu.pipeline_mode<synchronous>, transform_indices = @transform_1, window_bounds = array<i64: 32, 16>}, {pipeline_mode = #tpu.pipeline_mode<synchronous>, transform_indices = @transform_2, window_bounds = array<i64: 32, 1>}, {pipeline_mode = #tpu.pipeline_mode<synchronous>, transform_indices = @transform_3, window_bounds = array<i64: 16, 32>}, {pipeline_mode = #tpu.pipeline_mode<synchronous>, transform_indices = @transform_4, window_bounds = array<i64: 16, 1>}, {pipeline_mode = #tpu.pipeline_mode<synchronous>, transform_indices = @transform_5, window_bounds = array<i64: 2, 16>}, {pipeline_mode = #tpu.pipeline_mode<synchronous>, transform_indices = @transform_6, window_bounds = array<i64: 2, 1>}, {transform_indices = @transform_7, window_bounds = array<i64: 2, 8>}]} {
    %c0 = arith.constant 0 : index
    %c0_0 = arith.constant 0 : index
    %0 = vector.load %arg1[%c0, %c0_0] : memref<8x16xf32, #tpu.memory_space<vmem>>, vector<8x16xf32>
    %1 = tpu.transpose %0, [1, 0] : vector<8x16xf32> -> vector<16x8xf32>
    %2 = arith.truncf %1 : vector<16x8xf32> to vector<16x8xbf16>
    %c0_1 = arith.constant 0 : index
    %c0_2 = arith.constant 0 : index
    %3 = vector.load %arg2[%c0_1, %c0_2] : memref<32x16xbf16, #tpu.memory_space<vmem>>, vector<32x16xbf16>
    %cst = arith.constant dense<0.000000e+00> : vector<32x8xf32>
    %4 = tpu.matmul %3, %2, %cst {dimension_numbers = #tpu.dot_dimension_numbers<[1], [0], [0], [1], [0, 0, 1, 1], [], []>} : vector<32x16xbf16>, vector<16x8xbf16>, vector<32x8xf32> -> vector<32x8xf32>
    %c0_3 = arith.constant 0 : index
    %c0_4 = arith.constant 0 : index
    %5 = vector.load %arg3[%c0_3, %c0_4] : memref<32x1xf32, #tpu.memory_space<vmem>>, vector<32x1xf32>
    %6 = vector.broadcast %5 : vector<32x1xf32> to vector<32x8xf32>
    %7 = arith.addf %4, %6 : vector<32x8xf32>
    %cst_5 = arith.constant 0.000000e+00 : f32
    %8 = vector.broadcast %cst_5 : f32 to vector<32x8xf32>
    %9 = arith.maximumf %7, %8 : vector<32x8xf32>
    %c0_6 = arith.constant 0 : index
    %c0_7 = arith.constant 0 : index
    %10 = vector.load %arg4[%c0_6, %c0_7] : memref<16x32xbf16, #tpu.memory_space<vmem>>, vector<16x32xbf16>
    %11 = arith.truncf %9 : vector<32x8xf32> to vector<32x8xbf16>
    %cst_8 = arith.constant dense<0.000000e+00> : vector<16x8xf32>
    %12 = tpu.matmul %10, %11, %cst_8 {dimension_numbers = #tpu.dot_dimension_numbers<[1], [0], [0], [1], [0, 0, 1, 1], [], []>} : vector<16x32xbf16>, vector<32x8xbf16>, vector<16x8xf32> -> vector<16x8xf32>
    %c0_9 = arith.constant 0 : index
    %c0_10 = arith.constant 0 : index
    %13 = vector.load %arg5[%c0_9, %c0_10] : memref<16x1xf32, #tpu.memory_space<vmem>>, vector<16x1xf32>
    %14 = vector.broadcast %13 : vector<16x1xf32> to vector<16x8xf32>
    %15 = arith.addf %12, %14 : vector<16x8xf32>
    %cst_11 = arith.constant 0.000000e+00 : f32
    %16 = vector.broadcast %cst_11 : f32 to vector<16x8xf32>
    %17 = arith.maximumf %15, %16 : vector<16x8xf32>
    %c0_12 = arith.constant 0 : index
    %c0_13 = arith.constant 0 : index
    %18 = vector.load %arg6[%c0_12, %c0_13] : memref<2x16xbf16, #tpu.memory_space<vmem>>, vector<2x16xbf16>
    %19 = arith.truncf %17 : vector<16x8xf32> to vector<16x8xbf16>
    %cst_14 = arith.constant dense<0.000000e+00> : vector<2x8xf32>
    %20 = tpu.matmul %18, %19, %cst_14 {dimension_numbers = #tpu.dot_dimension_numbers<[1], [0], [0], [1], [0, 0, 1, 1], [], []>} : vector<2x16xbf16>, vector<16x8xbf16>, vector<2x8xf32> -> vector<2x8xf32>
    %c0_15 = arith.constant 0 : index
    %c0_16 = arith.constant 0 : index
    %21 = vector.load %arg7[%c0_15, %c0_16] : memref<2x1xf32, #tpu.memory_space<vmem>>, vector<2x1xf32>
    %22 = vector.broadcast %21 : vector<2x1xf32> to vector<2x8xf32>
    %23 = arith.addf %20, %22 : vector<2x8xf32>
    %cst_17 = arith.constant 0.000000e+00 : f32
    %24 = vector.broadcast %cst_17 : f32 to vector<2x8xf32>
    %25 = arith.subf %24, %23 : vector<2x8xf32>
    %26 = math.exp %25 : vector<2x8xf32>
    %cst_18 = arith.constant 1.000000e+00 : f32
    %27 = vector.broadcast %cst_18 : f32 to vector<2x8xf32>
    %28 = arith.addf %27, %26 : vector<2x8xf32>
    %cst_19 = arith.constant 1.000000e+00 : f32
    %29 = vector.broadcast %cst_19 : f32 to vector<2x8xf32>
    %30 = arith.divf %29, %28 : vector<2x8xf32>
    %c0_20 = arith.constant 0 : index
    %c0_21 = arith.constant 0 : index
    %31 = vector.load %arg8[%c0_20, %c0_21] : memref<2x8xf32, #tpu.memory_space<vmem>>, vector<2x8xf32>
    tpu.vector_store %arg8[%c0_20, %c0_21], %30 {strides = array<i32>} : memref<2x8xf32, #tpu.memory_space<vmem>>, vector<2x8xf32>,
    return
  }
  func.func @transform_0(%arg0: i32) -> (i32, i32) {
    %c0_i32 = arith.constant 0 : i32
    %c0_i32_0 = arith.constant 0 : i32
    return %arg0, %c0_i32 : i32, i32
  }
  func.func @transform_1(%arg0: i32) -> (i32, i32) {
    %c0_i32 = arith.constant 0 : i32
    %c0_i32_0 = arith.constant 0 : i32
    %c0_i32_1 = arith.constant 0 : i32
    return %c0_i32, %c0_i32_0 : i32, i32
  }
  func.func @transform_2(%arg0: i32) -> (i32, i32) {
    %c0_i32 = arith.constant 0 : i32
    %c0_i32_0 = arith.constant 0 : i32
    %c0_i32_1 = arith.constant 0 : i32
    return %c0_i32, %c0_i32_0 : i32, i32
  }
  func.func @transform_3(%arg0: i32) -> (i32, i32) {
    %c0_i32 = arith.constant 0 : i32
    %c0_i32_0 = arith.constant 0 : i32
    %c0_i32_1 = arith.constant 0 : i32
    return %c0_i32, %c0_i32_0 : i32, i32
  }
  func.func @transform_4(%arg0: i32) -> (i32, i32) {
    %c0_i32 = arith.constant 0 : i32
    %c0_i32_0 = arith.constant 0 : i32
    %c0_i32_1 = arith.constant 0 : i32
    return %c0_i32, %c0_i32_0 : i32, i32
  }
  func.func @transform_5(%arg0: i32) -> (i32, i32) {
    %c0_i32 = arith.constant 0 : i32
    %c0_i32_0 = arith.constant 0 : i32
    %c0_i32_1 = arith.constant 0 : i32
    return %c0_i32, %c0_i32_0 : i32, i32
  }
  func.func @transform_6(%arg0: i32) -> (i32, i32) {
    %c0_i32 = arith.constant 0 : i32
    %c0_i32_0 = arith.constant 0 : i32
    %c0_i32_1 = arith.constant 0 : i32
    return %c0_i32, %c0_i32_0 : i32, i32
  }
  func.func @transform_7(%arg0: i32) -> (i32, i32) {
    %c0_i32 = arith.constant 0 : i32
    %c0_i32_0 = arith.constant 0 : i32
    return %c0_i32, %arg0 : i32, i32
  }
}

</mosaic_0001>

<llo_original>
// kernel: tpu_custom_call.1
$region0: #{tpu_custom_call.1}
  #allocation0 [shape = 'u32[]', space=smem, size = 0x4, offset = 0x4, fixed_abs, tag = 'smem constant byte address 0x4 - core index']
  #allocation1 [shape = 'u32[72,128]{1,0:T(1,128)}', space=vmem, size = 0x9000, scoped, tag = 'internal scratch']
  %s0 = inlined_call_operand.vmem [shape: f32[8,16], index: 0, kind: input, shape index: {}]
  %s1 = inlined_call_operand.vmem [shape: bf16[32,16], index: 1, kind: input, shape index: {}]
  %s2 = inlined_call_operand.vmem [shape: f32[32,1], index: 2, kind: input, shape index: {}]
  %s3 = inlined_call_operand.vmem [shape: bf16[16,32], index: 3, kind: input, shape index: {}]
  %s4 = inlined_call_operand.vmem [shape: f32[16,1], index: 4, kind: input, shape index: {}]
  %s5 = inlined_call_operand.vmem [shape: bf16[2,16], index: 5, kind: input, shape index: {}]
  %s6 = inlined_call_operand.vmem [shape: f32[2,1], index: 6, kind: input, shape index: {}]
  %s7 = inlined_call_operand.hbm [shape: f32[2,8], index: 7, kind: output, shape index: {}]
  %s8 = sld [smem:[#allocation0]]
  $region38: #{tpu_custom_call.1} parent=0
    _
  %s10 = ssub.s32 1, %s8
  %s11 = scalar_select 0, %s10, %s8
  $region1: #{tpu_custom_call.1} parent=0
    #allocation2 [shape = 'u8[1024]{0}', space=vmem, size = 0x400, scoped, tag = 'output window, operand 0, single buffered']
    #allocation3 [shape = 's32[1]{0}', space=sflag, size = 0x4, scoped, tag = 'scoped memory for tpu_custom_call.1']
    %12 = vsyncpa [#allocation3], 0
    // Predicated region
    $region2: #{tpu_custom_call.1} parent=1 // pred_check
      _
    $region3: #{tpu_custom_call.1} parent=1 // pred_check_branch
      %14 = sbr.rel (0) target = $region5
    $region4: #{tpu_custom_call.1} parent=1 // pred_region
      _
    $region5: #{tpu_custom_call.1} parent=1 // pred_fallthru
      _
    // Predicated region
    $region6: #{tpu_custom_call.1} parent=1 // pred_check
      _
    $region7: #{tpu_custom_call.1} parent=1 // pred_check_branch
      %16 = sbr.rel (0) target = $region9
    $region8: #{tpu_custom_call.1} parent=1 // pred_region
      _
    $region9: #{tpu_custom_call.1} parent=1 // pred_fallthru
      _
    // Predicated region
    $region10: #{tpu_custom_call.1} parent=1 // pred_check
      _
    $region11: #{tpu_custom_call.1} parent=1 // pred_check_branch
      %18 = sbr.rel (0) target = $region13
    $region12: #{tpu_custom_call.1} parent=1 // pred_region
      _
    $region13: #{tpu_custom_call.1} parent=1 // pred_fallthru
      _
    // Predicated region
    $region14: #{tpu_custom_call.1} parent=1 // pred_check
      _
    $region15: #{tpu_custom_call.1} parent=1 // pred_check_branch
      %20 = sbr.rel (0) target = $region17
    $region16: #{tpu_custom_call.1} parent=1 // pred_region
      _
    $region17: #{tpu_custom_call.1} parent=1 // pred_fallthru
      _
    // Predicated region
    $region18: #{tpu_custom_call.1} parent=1 // pred_check
      _
    $region19: #{tpu_custom_call.1} parent=1 // pred_check_branch
      %22 = sbr.rel (0) target = $region21
    $region20: #{tpu_custom_call.1} parent=1 // pred_region
      _
    $region21: #{tpu_custom_call.1} parent=1 // pred_fallthru
      _
    // Predicated region
    $region22: #{tpu_custom_call.1} parent=1 // pred_check
      _
    $region23: #{tpu_custom_call.1} parent=1 // pred_check_branch
      %24 = sbr.rel (0) target = $region25
    $region24: #{tpu_custom_call.1} parent=1 // pred_region
      _
    $region25: #{tpu_custom_call.1} parent=1 // pred_fallthru
      _
    // Predicated region
    $region26: #{tpu_custom_call.1} parent=1 // pred_check
      _
    $region27: #{tpu_custom_call.1} parent=1 // pred_check_branch
      %26 = sbr.rel (0) target = $region29
    $region28: #{tpu_custom_call.1} parent=1 // pred_region
      _
    $region29: #{tpu_custom_call.1} parent=1 // pred_fallthru
      _
    %v28 = vld [vmem:[%s0] sm:$0xff]
    %29 = vxpose.xlu0.b32.start [1/16] %v28, 128
    %30 = vxpose.xlu0.b32.cont [2/16] 0.0, 128
    %31 = vxpose.xlu0.b32.cont [3/16] 0.0, 128
    %32 = vxpose.xlu0.b32.cont [4/16] 0.0, 128
    %33 = vxpose.xlu0.b32.cont [5/16] 0.0, 128
    %34 = vxpose.xlu0.b32.cont [6/16] 0.0, 128
    %35 = vxpose.xlu0.b32.cont [7/16] 0.0, 128
    %36 = vxpose.xlu0.b32.cont [8/16] 0.0, 128
    %37 = vxpose.xlu0.b32.cont [9/16] 0.0, 128
    %38 = vxpose.xlu0.b32.cont [10/16] 0.0, 128
    %39 = vxpose.xlu0.b32.cont [11/16] 0.0, 128
    %40 = vxpose.xlu0.b32.cont [12/16] 0.0, 128
    %41 = vxpose.xlu0.b32.cont [13/16] 0.0, 128
    %42 = vxpose.xlu0.b32.cont [14/16] 0.0, 128
    %43 = vxpose.xlu0.b32.cont [15/16] 0.0, 128
    %44 = vxpose.xlu0.b32.end [16/16] 0.0, 128
    %v45 = vpop.trf.xlu0
    %v46 = vpop.trf.xlu0
    %v47 = vpop.trf.xlu0
    %v48 = vpop.trf.xlu0
    %v49 = vpop.trf.xlu0
    %v50 = vpop.trf.xlu0
    %v51 = vpop.trf.xlu0
    %v52 = vpop.trf.xlu0
    %v53 = vpop.trf.xlu0
    %v54 = vpop.trf.xlu0
    %v55 = vpop.trf.xlu0
    %v56 = vpop.trf.xlu0
    %v57 = vpop.trf.xlu0
    %v58 = vpop.trf.xlu0
    %v59 = vpop.trf.xlu0
    %v60 = vpop.trf.xlu0
    %v61 = vpack.c.bf16 %v46, %v45
    %v62 = vld [vmem:[%s1] sm:$0xf]
    %v63 = vld [vmem:[%s1 + $0x4] sm:$0xf]
    %v64 = vld [vmem:[%s1 + $0x8] sm:$0xf]
    %v65 = vld [vmem:[%s1 + $0xc] sm:$0xf]
    %v66 = vld [vmem:[%s2] sm:$0xff]
    %v67 = vld [vmem:[%s2 + $0x8] sm:$0xff]
    %v68 = vld [vmem:[%s2 + $0x10] sm:$0xff]
    %v69 = vld [vmem:[%s2 + $0x18] sm:$0xff]
    %71 = vset.pattern.permute.xlu0 0
    %72 = vperm.xlu0 %71, %v66
    %v73 = vpop.permute.xlu0 %72
    %76 = vset.pattern.permute.xlu0 0
    %77 = vperm.xlu0 %76, %v67
    %v78 = vpop.permute.xlu0 %77
    %81 = vset.pattern.permute.xlu0 0
    %82 = vperm.xlu0 %81, %v68
    %v83 = vpop.permute.xlu0 %82
    %86 = vset.pattern.permute.xlu0 0
    %87 = vperm.xlu0 %86, %v69
    %v88 = vpop.permute.xlu0 %87
    %v94 = vunpack.c.l.b16 %v62
    %v95 = vunpack.c.l.b16 %v63
    %v96 = vunpack.c.l.b16 %v64
    %v97 = vunpack.c.l.b16 %v65
    %v98 = vpack.c.b16 %v95, %v94
    %v99 = vpack.c.b16 %v97, %v96
    %vm100 = vcmask 130048
    %v102 = vsel %vm100, %v98, 0
    %v105 = vsel %vm100, %v99, 0
    %107 = vmatpush.bf16.msra.mxu0 0
    %108 = vmatpush.bf16.msra.mxu0 0
    %109 = vmatpush.bf16.msra.mxu0 0
    %110 = vmatpush.bf16.msra.mxu0 0
    %111 = vmatpush.bf16.msra.mxu0 0
    %112 = vmatpush.bf16.msra.mxu0 0
    %113 = vmatpush.bf16.msra.mxu0 0
    %114 = vmatpush.bf16.msra.mxu0 %v61
    %115 = vmatmul.bf16.gmra.mxu0 %v102
    %v116 = vpop.f32.mrf.mxu0
    %v117 = vadd.f32 %v73, %v116
    %v118 = vpop.f32.mrf.mxu0
    %v119 = vadd.f32 %v78, %v118
    %120 = vmatmul.bf16.gmra.mxu0 %v105
    %v121 = vpop.f32.mrf.mxu0
    %v122 = vadd.f32 %v83, %v121
    %v123 = vpop.f32.mrf.mxu0
    %v124 = vadd.f32 %v88, %v123
    %125 = vdwg.mxu0
    %v126 = vmax.f32 %v117, 0.0
    %v127 = vmax.f32 %v119, 0.0
    %v128 = vmax.f32 %v122, 0.0
    %v129 = vmax.f32 %v124, 0.0
    %v130 = vld [vmem:[%s3] sm:$0xf]
    %v131 = vld [vmem:[%s3 + $0x4] sm:$0xf]
    %v132 = vpack.c.bf16 %v127, %v126
    %v133 = vpack.c.bf16 %v129, %v128
    %v134 = vld [vmem:[%s4] sm:$0xff]
    %v135 = vld [vmem:[%s4 + $0x8] sm:$0xff]
    %137 = vset.pattern.permute.xlu0 0
    %138 = vperm.xlu0 %137, %v134
    %v139 = vpop.permute.xlu0 %138
    %142 = vset.pattern.permute.xlu0 0
    %143 = vperm.xlu0 %142, %v135
    %v144 = vpop.permute.xlu0 %143
    %v148 = vunpack.c.l.b16 %v130
    %v149 = vunpack.c.l.b16 %v131
    %v150 = vpack.c.b16 %v149, %v148
    %vm151 = vcmask 261120
    %v153 = vsel %vm151, %v150, 0
    %155 = vmatpush.bf16.msra.mxu0 0
    %156 = vmatpush.bf16.msra.mxu0 0
    %157 = vmatpush.bf16.msra.mxu0 0
    %158 = vmatpush.bf16.msra.mxu0 0
    %159 = vmatpush.bf16.msra.mxu0 0
    %160 = vmatpush.bf16.msra.mxu0 0
    %161 = vmatpush.bf16.msra.mxu0 %v133
    %162 = vmatpush.bf16.msra.mxu0 %v132
    %163 = vmatmul.bf16.gmra.mxu0 %v153
    %v164 = vpop.f32.mrf.mxu0
    %v165 = vadd.f32 %v139, %v164
    %v166 = vpop.f32.mrf.mxu0
    %v167 = vadd.f32 %v144, %v166
    %168 = vdwg.mxu0
    %v169 = vmax.f32 %v165, 0.0
    %v170 = vmax.f32 %v167, 0.0
    %v171 = vld [vmem:[%s5] sm:$0x1]
    %v172 = vpack.c.bf16 %v170, %v169
    %v173 = vld [vmem:[%s6] sm:$0x3]
    %175 = vset.pattern.permute.xlu0 0
    %176 = vperm.xlu0 %175, %v173
    %v177 = vpop.permute.xlu0 %176
    %v180 = vsel %vm100, %v171, 0
    %182 = vmatpush.bf16.msra.mxu0 0
    %183 = vmatpush.bf16.msra.mxu0 0
    %184 = vmatpush.bf16.msra.mxu0 0
    %185 = vmatpush.bf16.msra.mxu0 0
    %186 = vmatpush.bf16.msra.mxu0 0
    %187 = vmatpush.bf16.msra.mxu0 0
    %188 = vmatpush.bf16.msra.mxu0 0
    %189 = vmatpush.bf16.msra.mxu0 %v172
    %190 = vmatmul.bf16.gmra.mxu0 %v180
    %v191 = vpop.f32.mrf.mxu0
    %v192 = vadd.f32 %v177, %v191
    %v193 = vpop.f32.mrf.mxu0
    %194 = vdwg.mxu0
    %v195 = vsub.f32 0.0, %v192
    %v196 = vmul.f32 %v195, 1.442695
    %v197 = vpow.pop %v196
    %v198 = vadd.f32 %v197, 1.0
    %v199 = vrcp.pop %v198
    %v200 = vmul.f32 %v198, %v199
    %v201 = vsub.f32 1.0, %v200
    %v202 = vmul.f32 %v199, %v201
    %v203 = vadd.f32 %v199, %v202
    %vm204 = vweird.f32 %v198
    %vm205 = vweird.f32 %v199
    %vm206 = vmor %vm204, %vm205
    %v207 = vsel %vm206, %v199, %v203
    %v208 = vand.u32 2147483647, %v198
    %vm209 = vcmp.eq.f32.partialorder %v208, 8.507059e+37
    %v210 = vand.u32 %v198, 2147483648
    %v211 = vor.u32 1.1754944e-38, %v210
    %v212 = vsel %vm209, %v211, %v207
    %v213 = vmul.f32 1.0, %v212
    %vm214 = vcmask 58368
    %215 = vst.msk [vmem:[#allocation2] sm:$0x3] %vm214, %v213
    // Predicated region
    $region30: #{tpu_custom_call.1} parent=1 // pred_check
      _
    $region31: #{tpu_custom_call.1} parent=1 // pred_check_branch
      %217 = sbr.rel (0) target = $region33
    $region32: #{tpu_custom_call.1} parent=1 // pred_region
      %219 = vsyncadd [#allocation3], 0
      %s221 = sshll.u32 [#allocation2], 4
      %s222 = int_to_ptr.vmem [resolvable:$true] %s221
      %s223 = sshll.u32 %s7, 4
      %s224 = int_to_ptr.hbm [resolvable:$true] %s223
      %226 = dma.vmem_to_hbm [thread:$0]  %s222, 32, %s224, [#allocation3]
    $region33: #{tpu_custom_call.1} parent=1 // pred_fallthru
      _
    // Predicated region
    $region34: #{tpu_custom_call.1} parent=1 // pred_check
      _
    $region35: #{tpu_custom_call.1} parent=1 // pred_check_branch
      %228 = sbr.rel (0) target = $region37
    $region36: #{tpu_custom_call.1} parent=1 // pred_region
      %230 = dma.done [#allocation3], 32
    $region37: #{tpu_custom_call.1} parent=1 // pred_fallthru
      _
    %231 = vsyncpa [#allocation3], 1

</llo_original>
